<compile_context>
chip_gen: v5e
topology: v5e:2x2
jax: 0.10.0
libtpu: 0.0.40
codegen_flags: <defaults>
</compile_context>

<pallas_src>
import functools

import jax
import jax.numpy as jnp
from jax.experimental import pallas as pl
from jax.experimental.pallas import tpu as pltpu


def _round_up(x, m):
    return ((x + m - 1) // m) * m


def _readout_kernel(x_ref, w_ref, b_ref, wo_ref, out_ref, *, d2p, pool):
    # Hidden projection + maxout, recomputed for every vocab tile (negligible vs
    # the HBM stream of the Wo tile; keeps the grid axis embarrassingly parallel).
    h = jnp.dot(x_ref[...], w_ref[...],
                preferred_element_type=jnp.float32) + b_ref[...]      # (B, pool*D2p)
    r = h[:, :d2p]
    for p in range(1, pool):                                          # static unroll
        r = jnp.maximum(r, h[:, p * d2p:(p + 1) * d2p])               # (B, D2p)
    r = r.astype(wo_ref.dtype)
    # Vocab tile of the readout matmul (Wo has no bias); f32 accumulation.
    out_ref[...] = jnp.dot(r, wo_ref[...],
                           preferred_element_type=jnp.float32
                           ).astype(out_ref.dtype)


def prepare_readout_params(W_w, W_b, Wo_w, *, pool_size=2, vocab_tile=512,
                           wo_dtype=jnp.bfloat16,
                           vmem_budget_bytes=24 * 1024 * 1024):
    """One-time (model-init) layout transform of the PyTorch-layout parameters.

    W_w : (D, F)   W_b : (D,)   Wo_w : (V, D // pool_size)   (nn.Linear layout)
    """
    D, _F = W_w.shape
    V, D2_in = Wo_w.shape
    assert D % pool_size == 0
    D2 = D // pool_size
    assert D2_in == D2
    D2p = _round_up(D2, 128)  # lane-align the maxout / contraction dim of r @ Wo

    # De-interleave maxout partners: pooled column k pairs rows {k*pool + p} of W.
    # Zero-padding is inert: max(0, ..., 0) = 0 and the padded Wo rows are zero.
    w_groups, b_groups = [], []
    for p in range(pool_size):
        wg = jnp.transpose(W_w[p::pool_size, :])                     # (F, D2)
        w_groups.append(jnp.pad(wg, ((0, 0), (0, D2p - D2))))
        b_groups.append(jnp.pad(W_b[p::pool_size], (0, D2p - D2)))
    w_cat = jnp.concatenate(w_groups, axis=1).astype(jnp.float32)    # (F, pool*D2p)
    b_cat = jnp.concatenate(b_groups).reshape(1, pool_size * D2p).astype(jnp.float32)

    # Cap the vocab tile so double-buffered Wo + output tiles fit a conservative
    # VMEM budget (v7x: 64 MiB physical / 32 MiB default scoped limit).
    wo_bytes = jnp.dtype(wo_dtype).itemsize
    per_lane = 2 * (D2p * wo_bytes + 64 * 4)      # 2x Wo tile + 2x out tile (B<=64)
    max_tile = max(128, (vmem_budget_bytes // per_lane) // 128 * 128)
    vocab_tile = int(min(vocab_tile, max_tile, _round_up(V, 128)))
    Vp = _round_up(V, vocab_tile)

    wo = jnp.transpose(Wo_w)                                          # (D2, V)
    wo = jnp.pad(wo, ((0, D2p - D2), (0, Vp - V))).astype(wo_dtype)   # (D2p, Vp)

    return dict(w_cat=w_cat, b_cat=b_cat, wo=wo, pool=pool_size,
                d2=D2, d2p=D2p, vocab=V, vocab_padded=Vp, vocab_tile=vocab_tile)


def nqg_readout(word_emb, context, decoder_state, params):
    """word_emb (B,E), context (B,Henc), decoder_state (B,Hdec).  Returns (B, V)."""
    x = jnp.concatenate([word_emb, context, decoder_state], axis=1).astype(jnp.float32)
    B, F = x.shape
    w_cat, b_cat, wo = params["w_cat"], params["b_cat"], params["wo"]
    pool, d2p = params["pool"], params["d2p"]
    V, Vp, tile = params["vocab"], params["vocab_padded"], params["vocab_tile"]
    assert w_cat.shape[0] == F

    grid = (Vp // tile,)
    kernel = functools.partial(_readout_kernel, d2p=d2p, pool=pool)

    cost = pl.CostEstimate(
        flops=2 * B * F * pool * d2p * grid[0] + 2 * B * d2p * Vp,
        transcendentals=0,
        bytes_accessed=(x.size * 4 + w_cat.size * 4 + b_cat.size * 4
                        + wo.size * wo.dtype.itemsize + B * Vp * 4))

    out = pl.pallas_call(
        kernel,
        out_shape=jax.ShapeDtypeStruct((B, Vp), jnp.float32),
        grid_spec=pltpu.PrefetchScalarGridSpec(
            num_scalar_prefetch=0,
            grid=grid,
            in_specs=[
                pl.BlockSpec((B, F), lambda j: (0, 0)),               # x (resident)
                pl.BlockSpec((F, pool * d2p), lambda j: (0, 0)),      # fused W (resident)
                pl.BlockSpec((1, pool * d2p), lambda j: (0, 0)),      # fused bias (resident)
                pl.BlockSpec((d2p, tile), lambda j: (0, j)),          # Wo tile (streamed)
            ],
            out_specs=pl.BlockSpec((B, tile), lambda j: (0, j)),
        ),
        compiler_params=pltpu.CompilerParams(
            dimension_semantics=("parallel",),
            vmem_limit_bytes=48 * 1024 * 1024),
        cost_estimate=cost,
    )(x, w_cat, b_cat, wo)

    return out[:, :V] if Vp != V else out


def nqg_readout_ref(word_emb, context, decoder_state, W_w, W_b, Wo_w, pool_size=2):
    x = jnp.concatenate([word_emb, context, decoder_state], axis=1)
    r = x @ W_w.T + W_b
    B, D = r.shape
    r = r.reshape(B, D // pool_size, pool_size).max(axis=-1)
    return r @ Wo_w.T


if __name__ == "__main__":
    # Small shapes consistent with the module's forward signature.
    B = 8
    embed_size = 32
    enc_hidden_size = 64
    dec_hidden_size = 32       # maxout -> 16
    vocab_size = 256
    pool_size = 2

    key = jax.random.PRNGKey(0)
    k1, k2, k3, k4, k5, k6 = jax.random.split(key, 6)

    word_emb = jax.random.normal(k1, (B, embed_size), jnp.float32)
    context = jax.random.normal(k2, (B, enc_hidden_size), jnp.float32)
    decoder_state = jax.random.normal(k3, (B, dec_hidden_size), jnp.float32)

    in_features = embed_size + enc_hidden_size + dec_hidden_size
    lim_w = 1.0 / (in_features ** 0.5)
    W_w = jax.random.uniform(k4, (dec_hidden_size, in_features), jnp.float32,
                             -lim_w, lim_w)
    W_b = jax.random.uniform(k5, (dec_hidden_size,), jnp.float32, -lim_w, lim_w)
    lim_o = 1.0 / ((dec_hidden_size // pool_size) ** 0.5)
    Wo_w = jax.random.uniform(k6, (vocab_size, dec_hidden_size // pool_size),
                              jnp.float32, -lim_o, lim_o)

    # One-time layout prep (would live at model init in a real decoder loop).
    params = prepare_readout_params(W_w, W_b, Wo_w, pool_size=pool_size,
                                    vocab_tile=512)

    energy = nqg_readout(word_emb, context, decoder_state, params)
    energy = jax.block_until_ready(energy)

    ref = nqg_readout_ref(word_emb, context, decoder_state, W_w, W_b, Wo_w,
                          pool_size=pool_size)
    assert energy.shape == (B, vocab_size)
    # bf16 Wo stream with f32 accumulation -> relaxed tolerance vs the f32 reference.
    assert jnp.allclose(energy, ref, atol=5e-2, rtol=5e-2), "mismatch vs reference"
    print("KERNEL_OK")
</pallas_src>

<mosaic_0001>
module attributes {stable_mosaic.version = 11 : i64} {
  func.func @_readout_kernel(%arg0: i32, %arg1: memref<8x128xf32, #tpu.memory_space<vmem>>, %arg2: memref<128x256xf32, #tpu.memory_space<vmem>>, %arg3: memref<1x256xf32, #tpu.memory_space<vmem>>, %arg4: memref<128x256xbf16, #tpu.memory_space<vmem>>, %arg5: memref<8x256xf32, #tpu.memory_space<vmem>>) attributes {dimension_semantics = [#tpu.dimension_semantics<parallel>], iteration_bounds = array<i64: 1>, scalar_prefetch = 0 : i64, scratch_operands = 0 : i64, tpu.core_type = #tpu.core_type<tc>, window_params = [{pipeline_mode = #tpu.pipeline_mode<synchronous>, transform_indices = @transform_0, window_bounds = array<i64: 8, 128>}, {pipeline_mode = #tpu.pipeline_mode<synchronous>, transform_indices = @transform_1, window_bounds = array<i64: 128, 256>}, {pipeline_mode = #tpu.pipeline_mode<synchronous>, transform_indices = @transform_2, window_bounds = array<i64: 1, 256>}, {transform_indices = @transform_3, window_bounds = array<i64: 128, 256>}, {transform_indices = @transform_4, window_bounds = array<i64: 8, 256>}]} {
    %c0 = arith.constant 0 : index
    %c0_0 = arith.constant 0 : index
    %0 = vector.load %arg1[%c0, %c0_0] : memref<8x128xf32, #tpu.memory_space<vmem>>, vector<8x128xf32>
    %c0_1 = arith.constant 0 : index
    %c0_2 = arith.constant 0 : index
    %1 = vector.load %arg2[%c0_1, %c0_2] : memref<128x256xf32, #tpu.memory_space<vmem>>, vector<128x256xf32>
    %cst = arith.constant dense<0.000000e+00> : vector<8x256xf32>
    %2 = tpu.matmul %0, %1, %cst {dimension_numbers = #tpu.dot_dimension_numbers<[1], [0], [0], [1], [0, 0, 1, 1], [], []>} : vector<8x128xf32>, vector<128x256xf32>, vector<8x256xf32> -> vector<8x256xf32>
    %c0_3 = arith.constant 0 : index
    %c0_4 = arith.constant 0 : index
    %3 = vector.load %arg3[%c0_3, %c0_4] : memref<1x256xf32, #tpu.memory_space<vmem>>, vector<1x256xf32>
    %4 = vector.broadcast %3 : vector<1x256xf32> to vector<8x256xf32>
    %5 = arith.addf %2, %4 : vector<8x256xf32>
    %6 = vector.extract_strided_slice %5 {offsets = [0, 0], sizes = [8, 128], strides = [1, 1]} : vector<8x256xf32> to vector<8x128xf32>
    %7 = vector.extract_strided_slice %5 {offsets = [0, 128], sizes = [8, 128], strides = [1, 1]} : vector<8x256xf32> to vector<8x128xf32>
    %8 = arith.maximumf %6, %7 : vector<8x128xf32>
    %9 = arith.truncf %8 : vector<8x128xf32> to vector<8x128xbf16>
    %c0_5 = arith.constant 0 : index
    %c0_6 = arith.constant 0 : index
    %10 = vector.load %arg4[%c0_5, %c0_6] : memref<128x256xbf16, #tpu.memory_space<vmem>>, vector<128x256xbf16>
    %cst_7 = arith.constant dense<0.000000e+00> : vector<8x256xf32>
    %11 = tpu.matmul %9, %10, %cst_7 {dimension_numbers = #tpu.dot_dimension_numbers<[1], [0], [0], [1], [0, 0, 1, 1], [], []>} : vector<8x128xbf16>, vector<128x256xbf16>, vector<8x256xf32> -> vector<8x256xf32>
    %c0_8 = arith.constant 0 : index
    %c0_9 = arith.constant 0 : index
    %12 = vector.load %arg5[%c0_8, %c0_9] : memref<8x256xf32, #tpu.memory_space<vmem>>, vector<8x256xf32>
    tpu.vector_store %arg5[%c0_8, %c0_9], %11 {strides = array<i32>} : memref<8x256xf32, #tpu.memory_space<vmem>>, vector<8x256xf32>,
    return
  }
  func.func @transform_0(%arg0: i32) -> (i32, i32) {
    %c0_i32 = arith.constant 0 : i32
    %c0_i32_0 = arith.constant 0 : i32
    %c0_i32_1 = arith.constant 0 : i32
    return %c0_i32, %c0_i32_0 : i32, i32
  }
  func.func @transform_1(%arg0: i32) -> (i32, i32) {
    %c0_i32 = arith.constant 0 : i32
    %c0_i32_0 = arith.constant 0 : i32
    %c0_i32_1 = arith.constant 0 : i32
    return %c0_i32, %c0_i32_0 : i32, i32
  }
  func.func @transform_2(%arg0: i32) -> (i32, i32) {
    %c0_i32 = arith.constant 0 : i32
    %c0_i32_0 = arith.constant 0 : i32
    %c0_i32_1 = arith.constant 0 : i32
    return %c0_i32, %c0_i32_0 : i32, i32
  }
  func.func @transform_3(%arg0: i32) -> (i32, i32) {
    %c0_i32 = arith.constant 0 : i32
    %c0_i32_0 = arith.constant 0 : i32
    return %c0_i32, %arg0 : i32, i32
  }
  func.func @transform_4(%arg0: i32) -> (i32, i32) {
    %c0_i32 = arith.constant 0 : i32
    %c0_i32_0 = arith.constant 0 : i32
    return %c0_i32, %arg0 : i32, i32
  }
}

</mosaic_0001>

<llo_original>
// kernel: tpu_custom_call.1
$region0: #{tpu_custom_call.1}
  #allocation0 [shape = 'u32[]', space=smem, size = 0x4, offset = 0x4, fixed_abs, tag = 'smem constant byte address 0x4 - core index']
  #allocation1 [shape = 'u32[72,128]{1,0:T(1,128)}', space=vmem, size = 0x9000, scoped, tag = 'internal scratch']
  %s0 = inlined_call_operand.hbm [shape: f32[8,128], index: 0, kind: input, shape index: {}]
  %s1 = inlined_call_operand.hbm [shape: f32[128,256], index: 1, kind: input, shape index: {}]
  %s2 = inlined_call_operand.hbm [shape: f32[1,256], index: 2, kind: input, shape index: {}]
  %s3 = inlined_call_operand.hbm [shape: bf16[128,256], index: 3, kind: input, shape index: {}]
  %s4 = inlined_call_operand.hbm [shape: f32[8,256], index: 4, kind: output, shape index: {}]
  %s5 = sld [smem:[#allocation0]]
  $region42: #{tpu_custom_call.1} parent=0
    _
  %s7 = ssub.s32 1, %s5
  %s8 = scalar_select 0, %s7, %s5
  $region1: #{tpu_custom_call.1} parent=0
    #allocation2 [shape = 'u8[4096]{0}', space=vmem, size = 0x1000, scoped, tag = 'input window, operand 0, single buffered']
    #allocation3 [shape = 's32[1]{0}', space=sflag, size = 0x4, scoped, tag = 'scoped memory for tpu_custom_call.1']
    #allocation4 [shape = 's32[1]{0}', space=sflag, size = 0x4, scoped, tag = 'scoped memory for tpu_custom_call.1']
    #allocation5 [shape = 'u8[131072]{0}', space=vmem, size = 0x20000, scoped, tag = 'input window, operand 1, single buffered']
    #allocation6 [shape = 's32[1]{0}', space=sflag, size = 0x4, scoped, tag = 'scoped memory for tpu_custom_call.1']
    #allocation7 [shape = 'u8[1024]{0}', space=vmem, size = 0x400, scoped, tag = 'input window, operand 2, single buffered']
    #allocation8 [shape = 'u8[65536]{0}', space=vmem, size = 0x10000, scoped, tag = 'input window, operand 3, single buffered']
    #allocation9 [shape = 's32[1]{0}', space=sflag, size = 0x4, scoped, tag = 'scoped memory for tpu_custom_call.1']
    #allocation10 [shape = 'u8[8192]{0}', space=vmem, size = 0x2000, scoped, tag = 'output window, operand 0, single buffered']
    %9 = vsyncpa [#allocation3], 0
    %10 = vsyncpa [#allocation6], 0
    %11 = vsyncpa [#allocation9], 0
    %12 = vsyncpa [#allocation4], 0
    // Predicated region
    $region2: #{tpu_custom_call.1} parent=1 // pred_check
      _
    $region3: #{tpu_custom_call.1} parent=1 // pred_check_branch
      %14 = sbr.rel (0) target = $region5
    $region4: #{tpu_custom_call.1} parent=1 // pred_region
      %16 = vsyncadd [#allocation3], 0
      %s18 = sshll.u32 %s0, 4
      %s19 = int_to_ptr.hbm [resolvable:$true] %s18
      %s20 = sshll.u32 [#allocation2], 4
      %s21 = int_to_ptr.vmem [resolvable:$true] %s20
      %23 = dma.hbm_to_vmem [thread:$0]  %s19, 128, %s21, [#allocation3]
    $region5: #{tpu_custom_call.1} parent=1 // pred_fallthru
      _
    // Predicated region
    $region6: #{tpu_custom_call.1} parent=1 // pred_check
      _
    $region7: #{tpu_custom_call.1} parent=1 // pred_check_branch
      %25 = sbr.rel (0) target = $region9
    $region8: #{tpu_custom_call.1} parent=1 // pred_region
      %27 = vsyncadd [#allocation6], 0
      %s28 = sshll.u32 %s1, 4
      %s29 = int_to_ptr.hbm [resolvable:$true] %s28
      %s30 = sshll.u32 [#allocation5], 4
      %s31 = int_to_ptr.vmem [resolvable:$true] %s30
      %36 = dma.hbm_to_vmem [thread:$0]  %s29, 4096, %s31, [#allocation6], 256, 256, 16
    $region9: #{tpu_custom_call.1} parent=1 // pred_fallthru
      _
    // Predicated region
    $region10: #{tpu_custom_call.1} parent=1 // pred_check
      _
    $region11: #{tpu_custom_call.1} parent=1 // pred_check_branch
      %38 = sbr.rel (0) target = $region13
    $region12: #{tpu_custom_call.1} parent=1 // pred_region
      %40 = vsyncadd [#allocation6], 0
      %s42 = sshll.u32 %s2, 4
      %s43 = int_to_ptr.hbm [resolvable:$true] %s42
      %s44 = sshll.u32 [#allocation7], 4
      %s45 = int_to_ptr.vmem [resolvable:$true] %s44
      %47 = dma.hbm_to_vmem [thread:$0]  %s43, 32, %s45, [#allocation6]
    $region13: #{tpu_custom_call.1} parent=1 // pred_fallthru
      _
    // Predicated region
    $region14: #{tpu_custom_call.1} parent=1 // pred_check
      _
    $region15: #{tpu_custom_call.1} parent=1 // pred_check_branch
      %49 = sbr.rel (0) target = $region17
    $region16: #{tpu_custom_call.1} parent=1 // pred_region
      %51 = vsyncadd [#allocation9], 0
      %s52 = sshll.u32 %s3, 4
      %s53 = int_to_ptr.hbm [resolvable:$true] %s52
      %s54 = sshll.u32 [#allocation8], 4
      %s55 = int_to_ptr.vmem [resolvable:$true] %s54
      %60 = dma.hbm_to_vmem [thread:$0]  %s53, 2048, %s55, [#allocation9], 128, 128, 8
    $region17: #{tpu_custom_call.1} parent=1 // pred_fallthru
      _
    // Predicated region
    $region18: #{tpu_custom_call.1} parent=1 // pred_check
      _
    $region19: #{tpu_custom_call.1} parent=1 // pred_check_branch
      %62 = sbr.rel (0) target = $region21
    $region20: #{tpu_custom_call.1} parent=1 // pred_region
      %64 = dma.done [#allocation3], 128
    $region21: #{tpu_custom_call.1} parent=1 // pred_fallthru
      _
    // Predicated region
    $region22: #{tpu_custom_call.1} parent=1 // pred_check
      _
    $region23: #{tpu_custom_call.1} parent=1 // pred_check_branch
      %66 = sbr.rel (0) target = $region25
    $region24: #{tpu_custom_call.1} parent=1 // pred_region
      %68 = dma.done [#allocation6], 4096
    $region25: #{tpu_custom_call.1} parent=1 // pred_fallthru
      _
    // Predicated region
    $region26: #{tpu_custom_call.1} parent=1 // pred_check
      _
    $region27: #{tpu_custom_call.1} parent=1 // pred_check_branch
      %70 = sbr.rel (0) target = $region29
    $region28: #{tpu_custom_call.1} parent=1 // pred_region
      %72 = dma.done [#allocation6], 32
    $region29: #{tpu_custom_call.1} parent=1 // pred_fallthru
      _
    // Predicated region
    $region30: #{tpu_custom_call.1} parent=1 // pred_check
      _
    $region31: #{tpu_custom_call.1} parent=1 // pred_check_branch
      %74 = sbr.rel (0) target = $region33
    $region32: #{tpu_custom_call.1} parent=1 // pred_region
      %76 = dma.done [#allocation9], 2048
    $region33: #{tpu_custom_call.1} parent=1 // pred_fallthru
      _
    %v77 = vld [vmem:[#allocation2] sm:$0xff]
    %v78 = vld [vmem:[#allocation5] sm:$0xff]
    %v79 = vld [vmem:[#allocation5 + $0x8] sm:$0xff]
    %v80 = vld [vmem:[#allocation5 + $0x10] sm:$0xff]
    %v81 = vld [vmem:[#allocation5 + $0x18] sm:$0xff]
    %v82 = vld [vmem:[#allocation5 + $0x20] sm:$0xff]
    %v83 = vld [vmem:[#allocation5 + $0x28] sm:$0xff]
    %v84 = vld [vmem:[#allocation5 + $0x30] sm:$0xff]
    %v85 = vld [vmem:[#allocation5 + $0x38] sm:$0xff]
    %v86 = vld [vmem:[#allocation5 + $0x40] sm:$0xff]
    %v87 = vld [vmem:[#allocation5 + $0x48] sm:$0xff]
    %v88 = vld [vmem:[#allocation5 + $0x50] sm:$0xff]
    %v89 = vld [vmem:[#allocation5 + $0x58] sm:$0xff]
    %v90 = vld [vmem:[#allocation5 + $0x60] sm:$0xff]
    %v91 = vld [vmem:[#allocation5 + $0x68] sm:$0xff]
    %v92 = vld [vmem:[#allocation5 + $0x70] sm:$0xff]
    %v93 = vld [vmem:[#allocation5 + $0x78] sm:$0xff]
    %v94 = vld [vmem:[#allocation5 + $0x80] sm:$0xff]
    %v95 = vld [vmem:[#allocation5 + $0x88] sm:$0xff]
    %v96 = vld [vmem:[#allocation5 + $0x90] sm:$0xff]
    %v97 = vld [vmem:[#allocation5 + $0x98] sm:$0xff]
    %v98 = vld [vmem:[#allocation5 + $0xa0] sm:$0xff]
    %v99 = vld [vmem:[#allocation5 + $0xa8] sm:$0xff]
    %v100 = vld [vmem:[#allocation5 + $0xb0] sm:$0xff]
    %v101 = vld [vmem:[#allocation5 + $0xb8] sm:$0xff]
    %v102 = vld [vmem:[#allocation5 + $0xc0] sm:$0xff]
    %v103 = vld [vmem:[#allocation5 + $0xc8] sm:$0xff]
    %v104 = vld [vmem:[#allocation5 + $0xd0] sm:$0xff]
    %v105 = vld [vmem:[#allocation5 + $0xd8] sm:$0xff]
    %v106 = vld [vmem:[#allocation5 + $0xe0] sm:$0xff]
    %v107 = vld [vmem:[#allocation5 + $0xe8] sm:$0xff]
    %v108 = vld [vmem:[#allocation5 + $0xf0] sm:$0xff]
    %v109 = vld [vmem:[#allocation5 + $0xf8] sm:$0xff]
    %v110 = vld [vmem:[#allocation7] sm:$0x3]
    %v112 = vperm.slane %v110, 0
    %v113 = vperm.slane %v110, 1
    %116 = vmatpush.msra.mxu0 %v108
    %117 = vmatpush.msra.mxu0 %v106
    %118 = vmatpush.msra.mxu0 %v104
    %119 = vmatpush.msra.mxu0 %v102
    %120 = vmatpush.msra.mxu0 %v100
    %121 = vmatpush.msra.mxu0 %v98
    %122 = vmatpush.msra.mxu0 %v96
    %123 = vmatpush.msra.mxu0 %v94
    %124 = vmatpush.msra.mxu0 %v92
    %125 = vmatpush.msra.mxu0 %v90
    %126 = vmatpush.msra.mxu0 %v88
    %127 = vmatpush.msra.mxu0 %v86
    %128 = vmatpush.msra.mxu0 %v84
    %129 = vmatpush.msra.mxu0 %v82
    %130 = vmatpush.msra.mxu0 %v80
    %131 = vmatpush.msra.mxu0 %v78
    %132 = vmatmul.f32.gmra.mxu0 %v77
    %v133 = vpop.f32.mrf.mxu0
    %v134 = vadd.f32 %v112, %v133
    %135 = vdwg.mxu0
    %136 = vmatpush.msra.mxu0 %v109
    %137 = vmatpush.msra.mxu0 %v107
    %138 = vmatpush.msra.mxu0 %v105
    %139 = vmatpush.msra.mxu0 %v103
    %140 = vmatpush.msra.mxu0 %v101
    %141 = vmatpush.msra.mxu0 %v99
    %142 = vmatpush.msra.mxu0 %v97
    %143 = vmatpush.msra.mxu0 %v95
    %144 = vmatpush.msra.mxu0 %v93
    %145 = vmatpush.msra.mxu0 %v91
    %146 = vmatpush.msra.mxu0 %v89
    %147 = vmatpush.msra.mxu0 %v87
    %148 = vmatpush.msra.mxu0 %v85
    %149 = vmatpush.msra.mxu0 %v83
    %150 = vmatpush.msra.mxu0 %v81
    %151 = vmatpush.msra.mxu0 %v79
    %152 = vmatmul.f32.gmra.mxu0 %v77
    %v153 = vpop.f32.mrf.mxu0
    %v154 = vadd.f32 %v113, %v153
    %155 = vdwg.mxu0
    %v156 = vmax.f32 %v134, %v154
    %v157 = vpack.c.bf16 %v156, %v156
    %v158 = vld [vmem:[#allocation8] sm:$0xff]
    %v159 = vld [vmem:[#allocation8 + $0x8] sm:$0xff]
    %v160 = vld [vmem:[#allocation8 + $0x10] sm:$0xff]
    %v161 = vld [vmem:[#allocation8 + $0x18] sm:$0xff]
    %v162 = vld [vmem:[#allocation8 + $0x20] sm:$0xff]
    %v163 = vld [vmem:[#allocation8 + $0x28] sm:$0xff]
    %v164 = vld [vmem:[#allocation8 + $0x30] sm:$0xff]
    %v165 = vld [vmem:[#allocation8 + $0x38] sm:$0xff]
    %v166 = vld [vmem:[#allocation8 + $0x40] sm:$0xff]
    %v167 = vld [vmem:[#allocation8 + $0x48] sm:$0xff]
    %v168 = vld [vmem:[#allocation8 + $0x50] sm:$0xff]
    %v169 = vld [vmem:[#allocation8 + $0x58] sm:$0xff]
    %v170 = vld [vmem:[#allocation8 + $0x60] sm:$0xff]
    %v171 = vld [vmem:[#allocation8 + $0x68] sm:$0xff]
    %v172 = vld [vmem:[#allocation8 + $0x70] sm:$0xff]
    %v173 = vld [vmem:[#allocation8 + $0x78] sm:$0xff]
    %v190 = vunpack.c.l.b16 %v158
    %v191 = vunpack.c.h.b16 %v158
    %v192 = vunpack.c.l.b16 %v159
    %v193 = vunpack.c.h.b16 %v159
    %v194 = vunpack.c.l.b16 %v160
    %v195 = vunpack.c.h.b16 %v160
    %v196 = vunpack.c.l.b16 %v161
    %v197 = vunpack.c.h.b16 %v161
    %v198 = vunpack.c.l.b16 %v162
    %v199 = vunpack.c.h.b16 %v162
    %v200 = vunpack.c.l.b16 %v163
    %v201 = vunpack.c.h.b16 %v163
    %v202 = vunpack.c.l.b16 %v164
    %v203 = vunpack.c.h.b16 %v164
    %v204 = vunpack.c.l.b16 %v165
    %v205 = vunpack.c.h.b16 %v165
    %v206 = vunpack.c.l.b16 %v166
    %v207 = vunpack.c.h.b16 %v166
    %v208 = vunpack.c.l.b16 %v167
    %v209 = vunpack.c.h.b16 %v167
    %v210 = vunpack.c.l.b16 %v168
    %v211 = vunpack.c.h.b16 %v168
    %v212 = vunpack.c.l.b16 %v169
    %v213 = vunpack.c.h.b16 %v169
    %v214 = vunpack.c.l.b16 %v170
    %v215 = vunpack.c.h.b16 %v170
    %v216 = vunpack.c.l.b16 %v171
    %v217 = vunpack.c.h.b16 %v171
    %v218 = vunpack.c.l.b16 %v172
    %v219 = vunpack.c.h.b16 %v172
    %v220 = vunpack.c.l.b16 %v173
    %v221 = vunpack.c.h.b16 %v173
    %v222 = vpack.c.b16 %v192, %v190
    %v223 = vpack.c.b16 %v193, %v191
    %v224 = vpack.c.b16 %v196, %v194
    %v225 = vpack.c.b16 %v197, %v195
    %v226 = vpack.c.b16 %v200, %v198
    %v227 = vpack.c.b16 %v201, %v199
    %v228 = vpack.c.b16 %v204, %v202
    %v229 = vpack.c.b16 %v205, %v203
    %v230 = vpack.c.b16 %v208, %v206
    %v231 = vpack.c.b16 %v209, %v207
    %v232 = vpack.c.b16 %v212, %v210
    %v233 = vpack.c.b16 %v213, %v211
    %v234 = vpack.c.b16 %v216, %v214
    %v235 = vpack.c.b16 %v217, %v215
    %v236 = vpack.c.b16 %v220, %v218
    %v237 = vpack.c.b16 %v221, %v219
    %254 = vmatpush.bf16.msra.mxu0 %v236
    %255 = vmatpush.bf16.msra.mxu0 %v234
    %256 = vmatpush.bf16.msra.mxu0 %v232
    %257 = vmatpush.bf16.msra.mxu0 %v230
    %258 = vmatpush.bf16.msra.mxu0 %v228
    %259 = vmatpush.bf16.msra.mxu0 %v226
    %260 = vmatpush.bf16.msra.mxu0 %v224
    %261 = vmatpush.bf16.msra.mxu0 %v222
    %262 = vmatmul.bf16.gmra.mxu0 %v157
    %v263 = vpop.f32.mrf.mxu0
    %v264 = vadd.f32 0.0, %v263
    %v265 = vpop.f32.mrf.mxu0
    %266 = vdwg.mxu0
    %267 = vmatpush.bf16.msra.mxu0 %v237
    %268 = vmatpush.bf16.msra.mxu0 %v235
    %269 = vmatpush.bf16.msra.mxu0 %v233
    %270 = vmatpush.bf16.msra.mxu0 %v231
    %271 = vmatpush.bf16.msra.mxu0 %v229
    %272 = vmatpush.bf16.msra.mxu0 %v227
    %273 = vmatpush.bf16.msra.mxu0 %v225
    %274 = vmatpush.bf16.msra.mxu0 %v223
    %275 = vmatmul.bf16.gmra.mxu0 %v157
    %v276 = vpop.f32.mrf.mxu0
    %v277 = vadd.f32 0.0, %v276
    %v278 = vpop.f32.mrf.mxu0
    %279 = vdwg.mxu0
    %280 = vst [vmem:[#allocation10] sm:$0xff] %v264
    %281 = vst [vmem:[#allocation10 + $0x8] sm:$0xff] %v277
    // Predicated region
    $region34: #{tpu_custom_call.1} parent=1 // pred_check
      _
    $region35: #{tpu_custom_call.1} parent=1 // pred_check_branch
      %283 = sbr.rel (0) target = $region37
    $region36: #{tpu_custom_call.1} parent=1 // pred_region
      %285 = vsyncadd [#allocation4], 0
      %s287 = sshll.u32 [#allocation10], 4
      %s288 = int_to_ptr.vmem [resolvable:$true] %s287
      %s289 = sshll.u32 %s4, 4
      %s290 = int_to_ptr.hbm [resolvable:$true] %s289
      %292 = dma.vmem_to_hbm [thread:$0]  %s288, 256, %s290, [#allocation4]
    $region37: #{tpu_custom_call.1} parent=1 // pred_fallthru
      _
    // Predicated region
    $region38: #{tpu_custom_call.1} parent=1 // pred_check
      _
    $region39: #{tpu_custom_call.1} parent=1 // pred_check_branch
      %294 = sbr.rel (0) target = $region41
    $region40: #{tpu_custom_call.1} parent=1 // pred_region
      %296 = dma.done [#allocation4], 256
    $region41: #{tpu_custom_call.1} parent=1 // pred_fallthru
      _
    %297 = vsyncpa [#allocation3], 1
    %298 = vsyncpa [#allocation6], 1
    %299 = vsyncpa [#allocation9], 1
    %300 = vsyncpa [#allocation4], 1

</llo_original>
